<compile_context>
chip_gen: v5e
topology: v5e:2x2
jax: 0.10.0
libtpu: 0.0.40
codegen_flags: <defaults>
</compile_context>

<pallas_src>
import functools

import jax
import jax.numpy as jnp
from jax.experimental import pallas as pl
from jax.experimental.pallas import tpu as pltpu

LANE = 128
SUBLANE = 8
TILE_B_MAX = 512   # measured Pallas sweet spot for streamed tiles is ~512-1024 rows
N3_PAD = 128       # logits 10 -> 128 for lane-dense output stores


def _round_up(x, m):
    return ((x + m - 1) // m) * m


def mlp_kernel(x_ref, w1_ref, b1_ref, w2_ref, b2_ref, w3_ref, b3_ref, o_ref):
    # x: (TILE_B, 896) bf16; w1: (896, 128) bf16; w2: (128, 64) bf16; w3: (64, 128) bf16.
    # Biases are (1, N) f32.  Matmuls accumulate in f32 on the MXU; bias-add/ReLU in
    # f32; activations re-cast to bf16 between layers to stay on the native MXU path.
    h1 = jnp.dot(x_ref[...], w1_ref[...], preferred_element_type=jnp.float32)
    h1 = jnp.maximum(h1 + b1_ref[...], 0.0).astype(jnp.bfloat16)
    h2 = jnp.dot(h1, w2_ref[...], preferred_element_type=jnp.float32)
    h2 = jnp.maximum(h2 + b2_ref[...], 0.0).astype(jnp.bfloat16)
    logits = jnp.dot(h2, w3_ref[...], preferred_element_type=jnp.float32) + b3_ref[...]
    o_ref[...] = logits.astype(o_ref.dtype)


def prepare_params(params):
    """One-time pad/cast of f32 (in, out)-layout params for the kernel.

    w1 rows zero-padded 784 -> 896, w3/b3 cols zero-padded 10 -> 128; weights cast to
    bf16, biases kept f32.  Returns (prepared_params, true_in_dim, true_out_dim).
    """
    w1, b1, w2, b2, w3, b3 = params
    k_in = w1.shape[0]
    k_pad = _round_up(k_in, LANE)
    n3 = w3.shape[1]
    w1p = jnp.pad(w1, ((0, k_pad - k_in), (0, 0))).astype(jnp.bfloat16)
    w2p = w2.astype(jnp.bfloat16)
    w3p = jnp.pad(w3, ((0, 0), (0, N3_PAD - n3))).astype(jnp.bfloat16)
    b1p = b1.astype(jnp.float32)
    b2p = b2.astype(jnp.float32)
    b3p = jnp.pad(b3, ((0, 0), (0, N3_PAD - n3))).astype(jnp.float32)
    return (w1p, b1p, w2p, b2p, w3p, b3p), k_in, n3


@functools.partial(jax.jit, static_argnames=("k_in", "n_out"))
def digit_model_forward(x, prepared, *, k_in=28 * 28, n_out=10):
    """x: (B, 1, 28, 28) NCHW float32.  Returns logits (B, n_out) float32."""
    w1, b1, w2, b2, w3, b3 = prepared
    k_pad, n1 = w1.shape
    n2 = w2.shape[1]

    B = x.shape[0]
    x_flat = x.reshape(B, -1).astype(jnp.float32)           # nn.Flatten (row-major)

    # Batch tile: at least one sublane group (8 rows), at most TILE_B_MAX.
    tile_b = min(TILE_B_MAX, _round_up(B, SUBLANE))
    b_pad = _round_up(B, tile_b)
    x_pad = jnp.pad(
        x_flat, ((0, b_pad - B), (0, k_pad - k_in))
    ).astype(jnp.bfloat16)

    grid = (b_pad // tile_b,)

    flops = 2 * b_pad * (k_pad * n1 + n1 * n2 + n2 * N3_PAD)
    bytes_accessed = (
        x_pad.size * 2                                      # bf16 activations in
        + (w1.size + w2.size + w3.size) * 2                 # bf16 weights
        + (b1.size + b2.size + b3.size) * 4                 # f32 biases
        + b_pad * N3_PAD * 4                                # f32 logits out
    )

    out = pl.pallas_call(
        mlp_kernel,
        out_shape=jax.ShapeDtypeStruct((b_pad, N3_PAD), jnp.float32),
        grid=grid,
        in_specs=[
            pl.BlockSpec((tile_b, k_pad), lambda i: (i, 0)),   # activations stream
            pl.BlockSpec((k_pad, n1), lambda i: (0, 0)),       # weights pinned in VMEM
            pl.BlockSpec((1, n1), lambda i: (0, 0)),
            pl.BlockSpec((n1, n2), lambda i: (0, 0)),
            pl.BlockSpec((1, n2), lambda i: (0, 0)),
            pl.BlockSpec((n2, N3_PAD), lambda i: (0, 0)),
            pl.BlockSpec((1, N3_PAD), lambda i: (0, 0)),
        ],
        out_specs=pl.BlockSpec((tile_b, N3_PAD), lambda i: (i, 0)),
        compiler_params=pltpu.CompilerParams(
            dimension_semantics=("parallel",),   # batch axis -> both TCs on v7x
            vmem_limit_bytes=32 * 1024 * 1024,
        ),
        cost_estimate=pl.CostEstimate(
            flops=flops, transcendentals=0, bytes_accessed=bytes_accessed
        ),
    )(x_pad, w1, b1, w2, b2, w3, b3)

    return out[:B, :n_out]


def init_params(key):
    """Deterministic init mirroring nn.Linear shapes (stored transposed: (in, out))."""
    k1, k2, k3, k4, k5, k6 = jax.random.split(key, 6)

    def linear(kw, kb, fan_in, fan_out):
        bound = 1.0 / jnp.sqrt(fan_in)
        w = jax.random.uniform(kw, (fan_in, fan_out), jnp.float32, -bound, bound)
        b = jax.random.uniform(kb, (1, fan_out), jnp.float32, -bound, bound)
        return w, b

    w1, b1 = linear(k1, k2, 28 * 28, 128)
    w2, b2 = linear(k3, k4, 128, 64)
    w3, b3 = linear(k5, k6, 64, 10)
    return (w1, b1, w2, b2, w3, b3)


if __name__ == "__main__":
    key = jax.random.PRNGKey(0)
    k_param, k_input = jax.random.split(key)

    params_f32 = init_params(k_param)
    prepared, k_in, n_out = prepare_params(params_f32)

    x = jax.random.normal(k_input, (2, 1, 28, 28), dtype=jnp.float32)

    logits = digit_model_forward(x, prepared, k_in=k_in, n_out=n_out)
    jax.block_until_ready(logits)

    # Reference check against plain f32 JAX (kernel matmuls are bf16 -> loose tol).
    w1, b1, w2, b2, w3, b3 = params_f32
    x_flat = x.reshape(x.shape[0], -1)
    h1 = jnp.maximum(x_flat @ w1 + b1, 0.0)
    h2 = jnp.maximum(h1 @ w2 + b2, 0.0)
    ref = h2 @ w3 + b3

    assert logits.shape == (2, 10)
    assert jnp.allclose(logits, ref, atol=5e-2, rtol=5e-2), float(
        jnp.max(jnp.abs(logits - ref))
    )

    print("KERNEL_OK")
</pallas_src>

<mosaic_0001>
module attributes {stable_mosaic.version = 11 : i64} {
  func.func @mlp_kernel(%arg0: i32, %arg1: memref<8x896xbf16, #tpu.memory_space<vmem>>, %arg2: memref<896x128xbf16, #tpu.memory_space<vmem>>, %arg3: memref<1x128xf32, #tpu.memory_space<vmem>>, %arg4: memref<128x64xbf16, #tpu.memory_space<vmem>>, %arg5: memref<1x64xf32, #tpu.memory_space<vmem>>, %arg6: memref<64x128xbf16, #tpu.memory_space<vmem>>, %arg7: memref<1x128xf32, #tpu.memory_space<vmem>>, %arg8: memref<8x128xf32, #tpu.memory_space<vmem>>) attributes {dimension_semantics = [#tpu.dimension_semantics<parallel>], iteration_bounds = array<i64: 1>, scalar_prefetch = 0 : i64, scratch_operands = 0 : i64, tpu.core_type = #tpu.core_type<tc>, window_params = [{transform_indices = @transform_0, window_bounds = array<i64: 8, 896>}, {pipeline_mode = #tpu.pipeline_mode<synchronous>, transform_indices = @transform_1, window_bounds = array<i64: 896, 128>}, {pipeline_mode = #tpu.pipeline_mode<synchronous>, transform_indices = @transform_2, window_bounds = array<i64: 1, 128>}, {pipeline_mode = #tpu.pipeline_mode<synchronous>, transform_indices = @transform_3, window_bounds = array<i64: 128, 64>}, {pipeline_mode = #tpu.pipeline_mode<synchronous>, transform_indices = @transform_4, window_bounds = array<i64: 1, 64>}, {pipeline_mode = #tpu.pipeline_mode<synchronous>, transform_indices = @transform_5, window_bounds = array<i64: 64, 128>}, {pipeline_mode = #tpu.pipeline_mode<synchronous>, transform_indices = @transform_6, window_bounds = array<i64: 1, 128>}, {transform_indices = @transform_7, window_bounds = array<i64: 8, 128>}]} {
    %c0 = arith.constant 0 : index
    %c0_0 = arith.constant 0 : index
    %0 = vector.load %arg1[%c0, %c0_0] : memref<8x896xbf16, #tpu.memory_space<vmem>>, vector<8x896xbf16>
    %c0_1 = arith.constant 0 : index
    %c0_2 = arith.constant 0 : index
    %1 = vector.load %arg2[%c0_1, %c0_2] : memref<896x128xbf16, #tpu.memory_space<vmem>>, vector<896x128xbf16>
    %cst = arith.constant dense<0.000000e+00> : vector<8x128xf32>
    %2 = tpu.matmul %0, %1, %cst {dimension_numbers = #tpu.dot_dimension_numbers<[1], [0], [0], [1], [0, 0, 1, 1], [], []>} : vector<8x896xbf16>, vector<896x128xbf16>, vector<8x128xf32> -> vector<8x128xf32>
    %c0_3 = arith.constant 0 : index
    %c0_4 = arith.constant 0 : index
    %3 = vector.load %arg3[%c0_3, %c0_4] : memref<1x128xf32, #tpu.memory_space<vmem>>, vector<1x128xf32>
    %4 = vector.broadcast %3 : vector<1x128xf32> to vector<8x128xf32>
    %5 = arith.addf %2, %4 : vector<8x128xf32>
    %cst_5 = arith.constant 0.000000e+00 : f32
    %6 = vector.broadcast %cst_5 : f32 to vector<8x128xf32>
    %7 = arith.maximumf %5, %6 : vector<8x128xf32>
    %8 = arith.truncf %7 : vector<8x128xf32> to vector<8x128xbf16>
    %c0_6 = arith.constant 0 : index
    %c0_7 = arith.constant 0 : index
    %9 = vector.load %arg4[%c0_6, %c0_7] : memref<128x64xbf16, #tpu.memory_space<vmem>>, vector<128x64xbf16>
    %cst_8 = arith.constant dense<0.000000e+00> : vector<8x64xf32>
    %10 = tpu.matmul %8, %9, %cst_8 {dimension_numbers = #tpu.dot_dimension_numbers<[1], [0], [0], [1], [0, 0, 1, 1], [], []>} : vector<8x128xbf16>, vector<128x64xbf16>, vector<8x64xf32> -> vector<8x64xf32>
    %c0_9 = arith.constant 0 : index
    %c0_10 = arith.constant 0 : index
    %11 = vector.load %arg5[%c0_9, %c0_10] : memref<1x64xf32, #tpu.memory_space<vmem>>, vector<1x64xf32>
    %12 = vector.broadcast %11 : vector<1x64xf32> to vector<8x64xf32>
    %13 = arith.addf %10, %12 : vector<8x64xf32>
    %cst_11 = arith.constant 0.000000e+00 : f32
    %14 = vector.broadcast %cst_11 : f32 to vector<8x64xf32>
    %15 = arith.maximumf %13, %14 : vector<8x64xf32>
    %16 = arith.truncf %15 : vector<8x64xf32> to vector<8x64xbf16>
    %c0_12 = arith.constant 0 : index
    %c0_13 = arith.constant 0 : index
    %17 = vector.load %arg6[%c0_12, %c0_13] : memref<64x128xbf16, #tpu.memory_space<vmem>>, vector<64x128xbf16>
    %cst_14 = arith.constant dense<0.000000e+00> : vector<8x128xf32>
    %18 = tpu.matmul %16, %17, %cst_14 {dimension_numbers = #tpu.dot_dimension_numbers<[1], [0], [0], [1], [0, 0, 1, 1], [], []>} : vector<8x64xbf16>, vector<64x128xbf16>, vector<8x128xf32> -> vector<8x128xf32>
    %c0_15 = arith.constant 0 : index
    %c0_16 = arith.constant 0 : index
    %19 = vector.load %arg7[%c0_15, %c0_16] : memref<1x128xf32, #tpu.memory_space<vmem>>, vector<1x128xf32>
    %20 = vector.broadcast %19 : vector<1x128xf32> to vector<8x128xf32>
    %21 = arith.addf %18, %20 : vector<8x128xf32>
    %c0_17 = arith.constant 0 : index
    %c0_18 = arith.constant 0 : index
    %22 = vector.load %arg8[%c0_17, %c0_18] : memref<8x128xf32, #tpu.memory_space<vmem>>, vector<8x128xf32>
    tpu.vector_store %arg8[%c0_17, %c0_18], %21 {strides = array<i32>} : memref<8x128xf32, #tpu.memory_space<vmem>>, vector<8x128xf32>,
    return
  }
  func.func @transform_0(%arg0: i32) -> (i32, i32) {
    %c0_i32 = arith.constant 0 : i32
    %c0_i32_0 = arith.constant 0 : i32
    return %arg0, %c0_i32 : i32, i32
  }
  func.func @transform_1(%arg0: i32) -> (i32, i32) {
    %c0_i32 = arith.constant 0 : i32
    %c0_i32_0 = arith.constant 0 : i32
    %c0_i32_1 = arith.constant 0 : i32
    return %c0_i32, %c0_i32_0 : i32, i32
  }
  func.func @transform_2(%arg0: i32) -> (i32, i32) {
    %c0_i32 = arith.constant 0 : i32
    %c0_i32_0 = arith.constant 0 : i32
    %c0_i32_1 = arith.constant 0 : i32
    return %c0_i32, %c0_i32_0 : i32, i32
  }
  func.func @transform_3(%arg0: i32) -> (i32, i32) {
    %c0_i32 = arith.constant 0 : i32
    %c0_i32_0 = arith.constant 0 : i32
    %c0_i32_1 = arith.constant 0 : i32
    return %c0_i32, %c0_i32_0 : i32, i32
  }
  func.func @transform_4(%arg0: i32) -> (i32, i32) {
    %c0_i32 = arith.constant 0 : i32
    %c0_i32_0 = arith.constant 0 : i32
    %c0_i32_1 = arith.constant 0 : i32
    return %c0_i32, %c0_i32_0 : i32, i32
  }
  func.func @transform_5(%arg0: i32) -> (i32, i32) {
    %c0_i32 = arith.constant 0 : i32
    %c0_i32_0 = arith.constant 0 : i32
    %c0_i32_1 = arith.constant 0 : i32
    return %c0_i32, %c0_i32_0 : i32, i32
  }
  func.func @transform_6(%arg0: i32) -> (i32, i32) {
    %c0_i32 = arith.constant 0 : i32
    %c0_i32_0 = arith.constant 0 : i32
    %c0_i32_1 = arith.constant 0 : i32
    return %c0_i32, %c0_i32_0 : i32, i32
  }
  func.func @transform_7(%arg0: i32) -> (i32, i32) {
    %c0_i32 = arith.constant 0 : i32
    %c0_i32_0 = arith.constant 0 : i32
    return %arg0, %c0_i32 : i32, i32
  }
}

</mosaic_0001>

<llo_original>
// kernel: digit_model_forward.1
$region0: #{digit_model_forward.1}
  #allocation0 [shape = 'u32[]', space=smem, size = 0x4, offset = 0x4, fixed_abs, tag = 'smem constant byte address 0x4 - core index']
  #allocation1 [shape = 'u32[72,128]{1,0:T(1,128)}', space=vmem, size = 0x9000, scoped, tag = 'internal scratch']
  %s0 = inlined_call_operand.vmem [shape: bf16[8,896], index: 0, kind: input, shape index: {}]
  %s1 = inlined_call_operand.hbm [shape: bf16[896,128], index: 1, kind: input, shape index: {}]
  %s2 = inlined_call_operand.vmem [shape: f32[1,128], index: 2, kind: input, shape index: {}]
  %s3 = inlined_call_operand.vmem [shape: bf16[128,64], index: 3, kind: input, shape index: {}]
  %s4 = inlined_call_operand.vmem [shape: f32[1,64], index: 4, kind: input, shape index: {}]
  %s5 = inlined_call_operand.vmem [shape: bf16[64,128], index: 5, kind: input, shape index: {}]
  %s6 = inlined_call_operand.vmem [shape: f32[1,128], index: 6, kind: input, shape index: {}]
  %s7 = inlined_call_operand.vmem [shape: f32[8,128], index: 7, kind: output, shape index: {}]
  %s8 = sld [smem:[#allocation0]]
  $region42: #{digit_model_forward.1} parent=0
    _
  %s10 = ssub.s32 1, %s8
  %s11 = scalar_select 0, %s10, %s8
  $region1: #{digit_model_forward.1} parent=0
    #allocation2 [shape = 'u8[229376]{0}', space=vmem, size = 0x38000, scoped, tag = 'input window, operand 1, single buffered']
    #allocation3 [shape = 's32[1]{0}', space=sflag, size = 0x4, scoped, tag = 'scoped memory for digit_model_forward.1']
    %12 = vsyncpa [#allocation3], 0
    // Predicated region
    $region2: #{digit_model_forward.1} parent=1 // pred_check
      _
    $region3: #{digit_model_forward.1} parent=1 // pred_check_branch
      %14 = sbr.rel (0) target = $region5
    $region4: #{digit_model_forward.1} parent=1 // pred_region
      _
    $region5: #{digit_model_forward.1} parent=1 // pred_fallthru
      _
    // Predicated region
    $region6: #{digit_model_forward.1} parent=1 // pred_check
      _
    $region7: #{digit_model_forward.1} parent=1 // pred_check_branch
      %16 = sbr.rel (0) target = $region9
    $region8: #{digit_model_forward.1} parent=1 // pred_region
      %18 = vsyncadd [#allocation3], 0
      %s19 = sshll.u32 %s1, 4
      %s20 = int_to_ptr.hbm [resolvable:$true] %s19
      %s21 = sshll.u32 [#allocation2], 4
      %s22 = int_to_ptr.vmem [resolvable:$true] %s21
      %27 = dma.hbm_to_vmem [thread:$0]  %s20, 7168, %s22, [#allocation3], 64, 64, 4
    $region9: #{digit_model_forward.1} parent=1 // pred_fallthru
      _
    // Predicated region
    $region10: #{digit_model_forward.1} parent=1 // pred_check
      _
    $region11: #{digit_model_forward.1} parent=1 // pred_check_branch
      %29 = sbr.rel (0) target = $region13
    $region12: #{digit_model_forward.1} parent=1 // pred_region
      _
    $region13: #{digit_model_forward.1} parent=1 // pred_fallthru
      _
    // Predicated region
    $region14: #{digit_model_forward.1} parent=1 // pred_check
      _
    $region15: #{digit_model_forward.1} parent=1 // pred_check_branch
      %31 = sbr.rel (0) target = $region17
    $region16: #{digit_model_forward.1} parent=1 // pred_region
      _
    $region17: #{digit_model_forward.1} parent=1 // pred_fallthru
      _
    // Predicated region
    $region18: #{digit_model_forward.1} parent=1 // pred_check
      _
    $region19: #{digit_model_forward.1} parent=1 // pred_check_branch
      %33 = sbr.rel (0) target = $region21
    $region20: #{digit_model_forward.1} parent=1 // pred_region
      _
    $region21: #{digit_model_forward.1} parent=1 // pred_fallthru
      _
    // Predicated region
    $region22: #{digit_model_forward.1} parent=1 // pred_check
      _
    $region23: #{digit_model_forward.1} parent=1 // pred_check_branch
      %35 = sbr.rel (0) target = $region25
    $region24: #{digit_model_forward.1} parent=1 // pred_region
      _
    $region25: #{digit_model_forward.1} parent=1 // pred_fallthru
      _
    // Predicated region
    $region26: #{digit_model_forward.1} parent=1 // pred_check
      _
    $region27: #{digit_model_forward.1} parent=1 // pred_check_branch
      %37 = sbr.rel (0) target = $region29
    $region28: #{digit_model_forward.1} parent=1 // pred_region
      _
    $region29: #{digit_model_forward.1} parent=1 // pred_fallthru
      _
    // Predicated region
    $region30: #{digit_model_forward.1} parent=1 // pred_check
      _
    $region31: #{digit_model_forward.1} parent=1 // pred_check_branch
      %39 = sbr.rel (0) target = $region33
    $region32: #{digit_model_forward.1} parent=1 // pred_region
      %41 = dma.done [#allocation3], 7168
    $region33: #{digit_model_forward.1} parent=1 // pred_fallthru
      _
    %v43 = vld [vmem:[%s0] sm:$0xff]
    %v44 = vld [vmem:[%s0 + $0x8] sm:$0xff]
    %v45 = vld [vmem:[%s0 + $0x10] sm:$0xff]
    %v46 = vld [vmem:[%s0 + $0x18] sm:$0xf]
    %v47 = vld [vmem:[#allocation2] sm:$0xf]
    %v48 = vld [vmem:[#allocation2 + $0x4] sm:$0xf]
    %v49 = vld [vmem:[#allocation2 + $0x8] sm:$0xf]
    %v50 = vld [vmem:[#allocation2 + $0xc] sm:$0xf]
    %v51 = vld [vmem:[#allocation2 + $0x10] sm:$0xf]
    %v52 = vld [vmem:[#allocation2 + $0x14] sm:$0xf]
    %v53 = vld [vmem:[#allocation2 + $0x18] sm:$0xf]
    %v54 = vld [vmem:[#allocation2 + $0x1c] sm:$0xf]
    %v55 = vld [vmem:[#allocation2 + $0x20] sm:$0xf]
    %v56 = vld [vmem:[#allocation2 + $0x24] sm:$0xf]
    %v57 = vld [vmem:[#allocation2 + $0x28] sm:$0xf]
    %v58 = vld [vmem:[#allocation2 + $0x2c] sm:$0xf]
    %v59 = vld [vmem:[#allocation2 + $0x30] sm:$0xf]
    %v60 = vld [vmem:[#allocation2 + $0x34] sm:$0xf]
    %v61 = vld [vmem:[#allocation2 + $0x38] sm:$0xf]
    %v62 = vld [vmem:[#allocation2 + $0x3c] sm:$0xf]
    %v63 = vld [vmem:[#allocation2 + $0x40] sm:$0xf]
    %v64 = vld [vmem:[#allocation2 + $0x44] sm:$0xf]
    %v65 = vld [vmem:[#allocation2 + $0x48] sm:$0xf]
    %v66 = vld [vmem:[#allocation2 + $0x4c] sm:$0xf]
    %v67 = vld [vmem:[#allocation2 + $0x50] sm:$0xf]
    %v68 = vld [vmem:[#allocation2 + $0x54] sm:$0xf]
    %v69 = vld [vmem:[#allocation2 + $0x58] sm:$0xf]
    %v70 = vld [vmem:[#allocation2 + $0x5c] sm:$0xf]
    %v71 = vld [vmem:[#allocation2 + $0x60] sm:$0xf]
    %v72 = vld [vmem:[#allocation2 + $0x64] sm:$0xf]
    %v73 = vld [vmem:[#allocation2 + $0x68] sm:$0xf]
    %v74 = vld [vmem:[#allocation2 + $0x6c] sm:$0xf]
    %v75 = vld [vmem:[#allocation2 + $0x70] sm:$0xf]
    %v76 = vld [vmem:[#allocation2 + $0x74] sm:$0xf]
    %v77 = vld [vmem:[#allocation2 + $0x78] sm:$0xf]
    %v78 = vld [vmem:[#allocation2 + $0x7c] sm:$0xf]
    %v79 = vld [vmem:[#allocation2 + $0x80] sm:$0xf]
    %v80 = vld [vmem:[#allocation2 + $0x84] sm:$0xf]
    %v81 = vld [vmem:[#allocation2 + $0x88] sm:$0xf]
    %v82 = vld [vmem:[#allocation2 + $0x8c] sm:$0xf]
    %v83 = vld [vmem:[#allocation2 + $0x90] sm:$0xf]
    %v84 = vld [vmem:[#allocation2 + $0x94] sm:$0xf]
    %v85 = vld [vmem:[#allocation2 + $0x98] sm:$0xf]
    %v86 = vld [vmem:[#allocation2 + $0x9c] sm:$0xf]
    %v87 = vld [vmem:[#allocation2 + $0xa0] sm:$0xf]
    %v88 = vld [vmem:[#allocation2 + $0xa4] sm:$0xf]
    %v89 = vld [vmem:[#allocation2 + $0xa8] sm:$0xf]
    %v90 = vld [vmem:[#allocation2 + $0xac] sm:$0xf]
    %v91 = vld [vmem:[#allocation2 + $0xb0] sm:$0xf]
    %v92 = vld [vmem:[#allocation2 + $0xb4] sm:$0xf]
    %v93 = vld [vmem:[#allocation2 + $0xb8] sm:$0xf]
    %v94 = vld [vmem:[#allocation2 + $0xbc] sm:$0xf]
    %v95 = vld [vmem:[#allocation2 + $0xc0] sm:$0xf]
    %v96 = vld [vmem:[#allocation2 + $0xc4] sm:$0xf]
    %v97 = vld [vmem:[#allocation2 + $0xc8] sm:$0xf]
    %v98 = vld [vmem:[#allocation2 + $0xcc] sm:$0xf]
    %v99 = vld [vmem:[#allocation2 + $0xd0] sm:$0xf]
    %v100 = vld [vmem:[#allocation2 + $0xd4] sm:$0xf]
    %v101 = vld [vmem:[#allocation2 + $0xd8] sm:$0xf]
    %v102 = vld [vmem:[#allocation2 + $0xdc] sm:$0xf]
    %v103 = vld [vmem:[#allocation2 + $0xe0] sm:$0xf]
    %v104 = vld [vmem:[#allocation2 + $0xe4] sm:$0xf]
    %v105 = vld [vmem:[#allocation2 + $0xe8] sm:$0xf]
    %v106 = vld [vmem:[#allocation2 + $0xec] sm:$0xf]
    %v107 = vld [vmem:[#allocation2 + $0xf0] sm:$0xf]
    %v108 = vld [vmem:[#allocation2 + $0xf4] sm:$0xf]
    %v109 = vld [vmem:[#allocation2 + $0xf8] sm:$0xf]
    %v110 = vld [vmem:[#allocation2 + $0xfc] sm:$0xf]
    %v111 = vld [vmem:[#allocation2 + $0x100] sm:$0xf]
    %v112 = vld [vmem:[#allocation2 + $0x104] sm:$0xf]
    %v113 = vld [vmem:[#allocation2 + $0x108] sm:$0xf]
    %v114 = vld [vmem:[#allocation2 + $0x10c] sm:$0xf]
    %v115 = vld [vmem:[#allocation2 + $0x110] sm:$0xf]
    %v116 = vld [vmem:[#allocation2 + $0x114] sm:$0xf]
    %v117 = vld [vmem:[#allocation2 + $0x118] sm:$0xf]
    %v118 = vld [vmem:[#allocation2 + $0x11c] sm:$0xf]
    %v119 = vld [vmem:[#allocation2 + $0x120] sm:$0xf]
    %v120 = vld [vmem:[#allocation2 + $0x124] sm:$0xf]
    %v121 = vld [vmem:[#allocation2 + $0x128] sm:$0xf]
    %v122 = vld [vmem:[#allocation2 + $0x12c] sm:$0xf]
    %v123 = vld [vmem:[#allocation2 + $0x130] sm:$0xf]
    %v124 = vld [vmem:[#allocation2 + $0x134] sm:$0xf]
    %v125 = vld [vmem:[#allocation2 + $0x138] sm:$0xf]
    %v126 = vld [vmem:[#allocation2 + $0x13c] sm:$0xf]
    %v127 = vld [vmem:[#allocation2 + $0x140] sm:$0xf]
    %v128 = vld [vmem:[#allocation2 + $0x144] sm:$0xf]
    %v129 = vld [vmem:[#allocation2 + $0x148] sm:$0xf]
    %v130 = vld [vmem:[#allocation2 + $0x14c] sm:$0xf]
    %v131 = vld [vmem:[#allocation2 + $0x150] sm:$0xf]
    %v132 = vld [vmem:[#allocation2 + $0x154] sm:$0xf]
    %v133 = vld [vmem:[#allocation2 + $0x158] sm:$0xf]
    %v134 = vld [vmem:[#allocation2 + $0x15c] sm:$0xf]
    %v135 = vld [vmem:[#allocation2 + $0x160] sm:$0xf]
    %v136 = vld [vmem:[#allocation2 + $0x164] sm:$0xf]
    %v137 = vld [vmem:[#allocation2 + $0x168] sm:$0xf]
    %v138 = vld [vmem:[#allocation2 + $0x16c] sm:$0xf]
    %v139 = vld [vmem:[#allocation2 + $0x170] sm:$0xf]
    %v140 = vld [vmem:[#allocation2 + $0x174] sm:$0xf]
    %v141 = vld [vmem:[#allocation2 + $0x178] sm:$0xf]
    %v142 = vld [vmem:[#allocation2 + $0x17c] sm:$0xf]
    %v143 = vld [vmem:[#allocation2 + $0x180] sm:$0xf]
    %v144 = vld [vmem:[#allocation2 + $0x184] sm:$0xf]
    %v145 = vld [vmem:[#allocation2 + $0x188] sm:$0xf]
    %v146 = vld [vmem:[#allocation2 + $0x18c] sm:$0xf]
    %v147 = vld [vmem:[#allocation2 + $0x190] sm:$0xf]
    %v148 = vld [vmem:[#allocation2 + $0x194] sm:$0xf]
    %v149 = vld [vmem:[#allocation2 + $0x198] sm:$0xf]
    %v150 = vld [vmem:[#allocation2 + $0x19c] sm:$0xf]
    %v151 = vld [vmem:[#allocation2 + $0x1a0] sm:$0xf]
    %v152 = vld [vmem:[#allocation2 + $0x1a4] sm:$0xf]
    %v153 = vld [vmem:[#allocation2 + $0x1a8] sm:$0xf]
    %v154 = vld [vmem:[#allocation2 + $0x1ac] sm:$0xf]
    %v155 = vld [vmem:[#allocation2 + $0x1b0] sm:$0xf]
    %v156 = vld [vmem:[#allocation2 + $0x1b4] sm:$0xf]
    %v157 = vld [vmem:[#allocation2 + $0x1b8] sm:$0xf]
    %v158 = vld [vmem:[#allocation2 + $0x1bc] sm:$0xf]
    %v159 = vld [vmem:[%s2] sm:$0x1]
    %v161 = vperm.slane %v159, 0
    %v167 = vunpack.c.l.b16 %v43
    %v168 = vunpack.c.h.b16 %v43
    %v169 = vunpack.c.l.b16 %v44
    %v170 = vunpack.c.h.b16 %v44
    %v171 = vunpack.c.l.b16 %v45
    %v172 = vunpack.c.h.b16 %v45
    %v173 = vunpack.c.l.b16 %v46
    %v174 = vpack.c.b16 %v167, %v167
    %v175 = vpack.c.b16 %v168, %v168
    %v176 = vpack.c.b16 %v169, %v169
    %v177 = vpack.c.b16 %v170, %v170
    %v178 = vpack.c.b16 %v171, %v171
    %v179 = vpack.c.b16 %v172, %v172
    %v180 = vpack.c.b16 %v173, %v173
    %v300 = vunpack.c.l.b16 %v47
    %v301 = vunpack.c.l.b16 %v48
    %v302 = vunpack.c.l.b16 %v49
    %v303 = vunpack.c.l.b16 %v50
    %v304 = vunpack.c.l.b16 %v51
    %v305 = vunpack.c.l.b16 %v52
    %v306 = vunpack.c.l.b16 %v53
    %v307 = vunpack.c.l.b16 %v54
    %v308 = vunpack.c.l.b16 %v55
    %v309 = vunpack.c.l.b16 %v56
    %v310 = vunpack.c.l.b16 %v57
    %v311 = vunpack.c.l.b16 %v58
    %v312 = vunpack.c.l.b16 %v59
    %v313 = vunpack.c.l.b16 %v60
    %v314 = vunpack.c.l.b16 %v61
    %v315 = vunpack.c.l.b16 %v62
    %v316 = vunpack.c.l.b16 %v63
    %v317 = vunpack.c.l.b16 %v64
    %v318 = vunpack.c.l.b16 %v65
    %v319 = vunpack.c.l.b16 %v66
    %v320 = vunpack.c.l.b16 %v67
    %v321 = vunpack.c.l.b16 %v68
    %v322 = vunpack.c.l.b16 %v69
    %v323 = vunpack.c.l.b16 %v70
    %v324 = vunpack.c.l.b16 %v71
    %v325 = vunpack.c.l.b16 %v72
    %v326 = vunpack.c.l.b16 %v73
    %v327 = vunpack.c.l.b16 %v74
    %v328 = vunpack.c.l.b16 %v75
    %v329 = vunpack.c.l.b16 %v76
    %v330 = vunpack.c.l.b16 %v77
    %v331 = vunpack.c.l.b16 %v78
    %v332 = vunpack.c.l.b16 %v79
    %v333 = vunpack.c.l.b16 %v80
    %v334 = vunpack.c.l.b16 %v81
    %v335 = vunpack.c.l.b16 %v82
    %v336 = vunpack.c.l.b16 %v83
    %v337 = vunpack.c.l.b16 %v84
    %v338 = vunpack.c.l.b16 %v85
    %v339 = vunpack.c.l.b16 %v86
    %v340 = vunpack.c.l.b16 %v87
    %v341 = vunpack.c.l.b16 %v88
    %v342 = vunpack.c.l.b16 %v89
    %v343 = vunpack.c.l.b16 %v90
    %v344 = vunpack.c.l.b16 %v91
    %v345 = vunpack.c.l.b16 %v92
    %v346 = vunpack.c.l.b16 %v93
    %v347 = vunpack.c.l.b16 %v94
    %v348 = vunpack.c.l.b16 %v95
    %v349 = vunpack.c.l.b16 %v96
    %v350 = vunpack.c.l.b16 %v97
    %v351 = vunpack.c.l.b16 %v98
    %v352 = vunpack.c.l.b16 %v99
    %v353 = vunpack.c.l.b16 %v100
    %v354 = vunpack.c.l.b16 %v101
    %v355 = vunpack.c.l.b16 %v102
    %v356 = vunpack.c.l.b16 %v103
    %v357 = vunpack.c.l.b16 %v104
    %v358 = vunpack.c.l.b16 %v105
    %v359 = vunpack.c.l.b16 %v106
    %v360 = vunpack.c.l.b16 %v107
    %v361 = vunpack.c.l.b16 %v108
    %v362 = vunpack.c.l.b16 %v109
    %v363 = vunpack.c.l.b16 %v110
    %v364 = vunpack.c.l.b16 %v111
    %v365 = vunpack.c.l.b16 %v112
    %v366 = vunpack.c.l.b16 %v113
    %v367 = vunpack.c.l.b16 %v114
    %v368 = vunpack.c.l.b16 %v115
    %v369 = vunpack.c.l.b16 %v116
    %v370 = vunpack.c.l.b16 %v117
    %v371 = vunpack.c.l.b16 %v118
    %v372 = vunpack.c.l.b16 %v119
    %v373 = vunpack.c.l.b16 %v120
    %v374 = vunpack.c.l.b16 %v121
    %v375 = vunpack.c.l.b16 %v122
    %v376 = vunpack.c.l.b16 %v123
    %v377 = vunpack.c.l.b16 %v124
    %v378 = vunpack.c.l.b16 %v125
    %v379 = vunpack.c.l.b16 %v126
    %v380 = vunpack.c.l.b16 %v127
    %v381 = vunpack.c.l.b16 %v128
    %v382 = vunpack.c.l.b16 %v129
    %v383 = vunpack.c.l.b16 %v130
    %v384 = vunpack.c.l.b16 %v131
    %v385 = vunpack.c.l.b16 %v132
    %v386 = vunpack.c.l.b16 %v133
    %v387 = vunpack.c.l.b16 %v134
    %v388 = vunpack.c.l.b16 %v135
    %v389 = vunpack.c.l.b16 %v136
    %v390 = vunpack.c.l.b16 %v137
    %v391 = vunpack.c.l.b16 %v138
    %v392 = vunpack.c.l.b16 %v139
    %v393 = vunpack.c.l.b16 %v140
    %v394 = vunpack.c.l.b16 %v141
    %v395 = vunpack.c.l.b16 %v142
    %v396 = vunpack.c.l.b16 %v143
    %v397 = vunpack.c.l.b16 %v144
    %v398 = vunpack.c.l.b16 %v145
    %v399 = vunpack.c.l.b16 %v146
    %v400 = vunpack.c.l.b16 %v147
    %v401 = vunpack.c.l.b16 %v148
    %v402 = vunpack.c.l.b16 %v149
    %v403 = vunpack.c.l.b16 %v150
    %v404 = vunpack.c.l.b16 %v151
    %v405 = vunpack.c.l.b16 %v152
    %v406 = vunpack.c.l.b16 %v153
    %v407 = vunpack.c.l.b16 %v154
    %v408 = vunpack.c.l.b16 %v155
    %v409 = vunpack.c.l.b16 %v156
    %v410 = vunpack.c.l.b16 %v157
    %v411 = vunpack.c.l.b16 %v158
    %v412 = vpack.c.b16 %v301, %v300
    %v413 = vpack.c.b16 %v303, %v302
    %v414 = vpack.c.b16 %v305, %v304
    %v415 = vpack.c.b16 %v307, %v306
    %v416 = vpack.c.b16 %v309, %v308
    %v417 = vpack.c.b16 %v311, %v310
    %v418 = vpack.c.b16 %v313, %v312
    %v419 = vpack.c.b16 %v315, %v314
    %v420 = vpack.c.b16 %v317, %v316
    %v421 = vpack.c.b16 %v319, %v318
    %v422 = vpack.c.b16 %v321, %v320
    %v423 = vpack.c.b16 %v323, %v322
    %v424 = vpack.c.b16 %v325, %v324
    %v425 = vpack.c.b16 %v327, %v326
    %v426 = vpack.c.b16 %v329, %v328
    %v427 = vpack.c.b16 %v331, %v330
    %v428 = vpack.c.b16 %v333, %v332
    %v429 = vpack.c.b16 %v335, %v334
    %v430 = vpack.c.b16 %v337, %v336
    %v431 = vpack.c.b16 %v339, %v338
    %v432 = vpack.c.b16 %v341, %v340
    %v433 = vpack.c.b16 %v343, %v342
    %v434 = vpack.c.b16 %v345, %v344
    %v435 = vpack.c.b16 %v347, %v346
    %v436 = vpack.c.b16 %v349, %v348
    %v437 = vpack.c.b16 %v351, %v350
    %v438 = vpack.c.b16 %v353, %v352
    %v439 = vpack.c.b16 %v355, %v354
    %v440 = vpack.c.b16 %v357, %v356
    %v441 = vpack.c.b16 %v359, %v358
    %v442 = vpack.c.b16 %v361, %v360
    %v443 = vpack.c.b16 %v363, %v362
    %v444 = vpack.c.b16 %v365, %v364
    %v445 = vpack.c.b16 %v367, %v366
    %v446 = vpack.c.b16 %v369, %v368
    %v447 = vpack.c.b16 %v371, %v370
    %v448 = vpack.c.b16 %v373, %v372
    %v449 = vpack.c.b16 %v375, %v374
    %v450 = vpack.c.b16 %v377, %v376
    %v451 = vpack.c.b16 %v379, %v378
    %v452 = vpack.c.b16 %v381, %v380
    %v453 = vpack.c.b16 %v383, %v382
    %v454 = vpack.c.b16 %v385, %v384
    %v455 = vpack.c.b16 %v387, %v386
    %v456 = vpack.c.b16 %v389, %v388
    %v457 = vpack.c.b16 %v391, %v390
    %v458 = vpack.c.b16 %v393, %v392
    %v459 = vpack.c.b16 %v395, %v394
    %v460 = vpack.c.b16 %v397, %v396
    %v461 = vpack.c.b16 %v399, %v398
    %v462 = vpack.c.b16 %v401, %v400
    %v463 = vpack.c.b16 %v403, %v402
    %v464 = vpack.c.b16 %v405, %v404
    %v465 = vpack.c.b16 %v407, %v406
    %v466 = vpack.c.b16 %v409, %v408
    %v467 = vpack.c.b16 %v411, %v410
    %524 = vmatpush.bf16.msra.mxu0 %v419
    %525 = vmatpush.bf16.msra.mxu0 %v418
    %526 = vmatpush.bf16.msra.mxu0 %v417
    %527 = vmatpush.bf16.msra.mxu0 %v416
    %528 = vmatpush.bf16.msra.mxu0 %v415
    %529 = vmatpush.bf16.msra.mxu0 %v414
    %530 = vmatpush.bf16.msra.mxu0 %v413
    %531 = vmatpush.bf16.msra.mxu0 %v412
    %532 = vmatmul.bf16.gmra.mxu0 %v174
    %v533 = vpop.f32.mrf.mxu0
    %v534 = vadd.f32 %v161, %v533
    %v535 = vpop.f32.mrf.mxu0
    %536 = vdwg.mxu0
    %537 = vmatpush.bf16.msra.mxu0 %v427
    %538 = vmatpush.bf16.msra.mxu0 %v426
    %539 = vmatpush.bf16.msra.mxu0 %v425
    %540 = vmatpush.bf16.msra.mxu0 %v424
    %541 = vmatpush.bf16.msra.mxu0 %v423
    %542 = vmatpush.bf16.msra.mxu0 %v422
    %543 = vmatpush.bf16.msra.mxu0 %v421
    %544 = vmatpush.bf16.msra.mxu0 %v420
    %545 = vmatmul.bf16.gmra.mxu0 %v175
    %v546 = vpop.f32.mrf.mxu0
    %v547 = vadd.f32 %v534, %v546
    %v548 = vpop.f32.mrf.mxu0
    %549 = vdwg.mxu0
    %550 = vmatpush.bf16.msra.mxu0 %v435
    %551 = vmatpush.bf16.msra.mxu0 %v434
    %552 = vmatpush.bf16.msra.mxu0 %v433
    %553 = vmatpush.bf16.msra.mxu0 %v432
    %554 = vmatpush.bf16.msra.mxu0 %v431
    %555 = vmatpush.bf16.msra.mxu0 %v430
    %556 = vmatpush.bf16.msra.mxu0 %v429
    %557 = vmatpush.bf16.msra.mxu0 %v428
    %558 = vmatmul.bf16.gmra.mxu0 %v176
    %v559 = vpop.f32.mrf.mxu0
    %v560 = vadd.f32 %v547, %v559
    %v561 = vpop.f32.mrf.mxu0
    %562 = vdwg.mxu0
    %563 = vmatpush.bf16.msra.mxu0 %v443
    %564 = vmatpush.bf16.msra.mxu0 %v442
    %565 = vmatpush.bf16.msra.mxu0 %v441
    %566 = vmatpush.bf16.msra.mxu0 %v440
    %567 = vmatpush.bf16.msra.mxu0 %v439
    %568 = vmatpush.bf16.msra.mxu0 %v438
    %569 = vmatpush.bf16.msra.mxu0 %v437
    %570 = vmatpush.bf16.msra.mxu0 %v436
    %571 = vmatmul.bf16.gmra.mxu0 %v177
    %v572 = vpop.f32.mrf.mxu0
    %v573 = vadd.f32 %v560, %v572
    %v574 = vpop.f32.mrf.mxu0
    %575 = vdwg.mxu0
    %576 = vmatpush.bf16.msra.mxu0 %v451
    %577 = vmatpush.bf16.msra.mxu0 %v450
    %578 = vmatpush.bf16.msra.mxu0 %v449
    %579 = vmatpush.bf16.msra.mxu0 %v448
    %580 = vmatpush.bf16.msra.mxu0 %v447
    %581 = vmatpush.bf16.msra.mxu0 %v446
    %582 = vmatpush.bf16.msra.mxu0 %v445
    %583 = vmatpush.bf16.msra.mxu0 %v444
    %584 = vmatmul.bf16.gmra.mxu0 %v178
    %v585 = vpop.f32.mrf.mxu0
    %v586 = vadd.f32 %v573, %v585
    %v587 = vpop.f32.mrf.mxu0
    %588 = vdwg.mxu0
    %589 = vmatpush.bf16.msra.mxu0 %v459
    %590 = vmatpush.bf16.msra.mxu0 %v458
    %591 = vmatpush.bf16.msra.mxu0 %v457
    %592 = vmatpush.bf16.msra.mxu0 %v456
    %593 = vmatpush.bf16.msra.mxu0 %v455
    %594 = vmatpush.bf16.msra.mxu0 %v454
    %595 = vmatpush.bf16.msra.mxu0 %v453
    %596 = vmatpush.bf16.msra.mxu0 %v452
    %597 = vmatmul.bf16.gmra.mxu0 %v179
    %v598 = vpop.f32.mrf.mxu0
    %v599 = vadd.f32 %v586, %v598
    %v600 = vpop.f32.mrf.mxu0
    %601 = vdwg.mxu0
    %602 = vmatpush.bf16.msra.mxu0 %v467
    %603 = vmatpush.bf16.msra.mxu0 %v466
    %604 = vmatpush.bf16.msra.mxu0 %v465
    %605 = vmatpush.bf16.msra.mxu0 %v464
    %606 = vmatpush.bf16.msra.mxu0 %v463
    %607 = vmatpush.bf16.msra.mxu0 %v462
    %608 = vmatpush.bf16.msra.mxu0 %v461
    %609 = vmatpush.bf16.msra.mxu0 %v460
    %610 = vmatmul.bf16.gmra.mxu0 %v180
    %v611 = vpop.f32.mrf.mxu0
    %v612 = vadd.f32 %v599, %v611
    %v613 = vpop.f32.mrf.mxu0
    %614 = vdwg.mxu0
    %v615 = vmax.f32 %v612, 0.0
    %v616 = vpack.c.bf16 %v615, %v615
    %v617 = vld [vmem:[%s3] sm:$0xf]
    %v618 = vld [vmem:[%s3 + $0x4] sm:$0xf]
    %v619 = vld [vmem:[%s3 + $0x8] sm:$0xf]
    %v620 = vld [vmem:[%s3 + $0xc] sm:$0xf]
    %v621 = vld [vmem:[%s3 + $0x10] sm:$0xf]
    %v622 = vld [vmem:[%s3 + $0x14] sm:$0xf]
    %v623 = vld [vmem:[%s3 + $0x18] sm:$0xf]
    %v624 = vld [vmem:[%s3 + $0x1c] sm:$0xf]
    %v625 = vld [vmem:[%s3 + $0x20] sm:$0xf]
    %v626 = vld [vmem:[%s3 + $0x24] sm:$0xf]
    %v627 = vld [vmem:[%s3 + $0x28] sm:$0xf]
    %v628 = vld [vmem:[%s3 + $0x2c] sm:$0xf]
    %v629 = vld [vmem:[%s3 + $0x30] sm:$0xf]
    %v630 = vld [vmem:[%s3 + $0x34] sm:$0xf]
    %v631 = vld [vmem:[%s3 + $0x38] sm:$0xf]
    %v632 = vld [vmem:[%s3 + $0x3c] sm:$0xf]
    %v633 = vld [vmem:[%s4] sm:$0x1]
    %v635 = vperm.slane %v633, 0
    %v653 = vunpack.c.l.b16 %v617
    %v654 = vunpack.c.l.b16 %v618
    %v655 = vunpack.c.l.b16 %v619
    %v656 = vunpack.c.l.b16 %v620
    %v657 = vunpack.c.l.b16 %v621
    %v658 = vunpack.c.l.b16 %v622
    %v659 = vunpack.c.l.b16 %v623
    %v660 = vunpack.c.l.b16 %v624
    %v661 = vunpack.c.l.b16 %v625
    %v662 = vunpack.c.l.b16 %v626
    %v663 = vunpack.c.l.b16 %v627
    %v664 = vunpack.c.l.b16 %v628
    %v665 = vunpack.c.l.b16 %v629
    %v666 = vunpack.c.l.b16 %v630
    %v667 = vunpack.c.l.b16 %v631
    %v668 = vunpack.c.l.b16 %v632
    %v669 = vpack.c.b16 %v654, %v653
    %v670 = vpack.c.b16 %v656, %v655
    %v671 = vpack.c.b16 %v658, %v657
    %v672 = vpack.c.b16 %v660, %v659
    %v673 = vpack.c.b16 %v662, %v661
    %v674 = vpack.c.b16 %v664, %v663
    %v675 = vpack.c.b16 %v666, %v665
    %v676 = vpack.c.b16 %v668, %v667
    %685 = vmatpush.bf16.msra.mxu0 %v676
    %686 = vmatpush.bf16.msra.mxu0 %v675
    %687 = vmatpush.bf16.msra.mxu0 %v674
    %688 = vmatpush.bf16.msra.mxu0 %v673
    %689 = vmatpush.bf16.msra.mxu0 %v672
    %690 = vmatpush.bf16.msra.mxu0 %v671
    %691 = vmatpush.bf16.msra.mxu0 %v670
    %692 = vmatpush.bf16.msra.mxu0 %v669
    %693 = vmatmul.bf16.gmra.mxu0 %v616
    %v694 = vpop.f32.mrf.mxu0
    %v695 = vadd.f32 %v635, %v694
    %v696 = vpop.f32.mrf.mxu0
    %697 = vdwg.mxu0
    %v698 = vmax.f32 %v695, 0.0
    %v699 = vpack.c.bf16 %v698, %v698
    %v700 = vld [vmem:[%s5] sm:$0xf]
    %v701 = vld [vmem:[%s5 + $0x4] sm:$0xf]
    %v702 = vld [vmem:[%s5 + $0x8] sm:$0xf]
    %v703 = vld [vmem:[%s5 + $0xc] sm:$0xf]
    %v704 = vld [vmem:[%s5 + $0x10] sm:$0xf]
    %v705 = vld [vmem:[%s5 + $0x14] sm:$0xf]
    %v706 = vld [vmem:[%s5 + $0x18] sm:$0xf]
    %v707 = vld [vmem:[%s5 + $0x1c] sm:$0xf]
    %v708 = vld [vmem:[%s6] sm:$0x1]
    %v710 = vperm.slane %v708, 0
    %v720 = vunpack.c.l.b16 %v700
    %v721 = vunpack.c.l.b16 %v701
    %v722 = vunpack.c.l.b16 %v702
    %v723 = vunpack.c.l.b16 %v703
    %v724 = vunpack.c.l.b16 %v704
    %v725 = vunpack.c.l.b16 %v705
    %v726 = vunpack.c.l.b16 %v706
    %v727 = vunpack.c.l.b16 %v707
    %v728 = vpack.c.b16 %v721, %v720
    %v729 = vpack.c.b16 %v723, %v722
    %v730 = vpack.c.b16 %v725, %v724
    %v731 = vpack.c.b16 %v727, %v726
    %vm736 = vcmask 523264
    %v738 = vsel %vm736, %v699, 0
    %740 = vmatpush.bf16.msra.mxu0 0
    %741 = vmatpush.bf16.msra.mxu0 0
    %742 = vmatpush.bf16.msra.mxu0 0
    %743 = vmatpush.bf16.msra.mxu0 0
    %744 = vmatpush.bf16.msra.mxu0 %v731
    %745 = vmatpush.bf16.msra.mxu0 %v730
    %746 = vmatpush.bf16.msra.mxu0 %v729
    %747 = vmatpush.bf16.msra.mxu0 %v728
    %748 = vmatmul.bf16.gmra.mxu0 %v738
    %v749 = vpop.f32.mrf.mxu0
    %v750 = vadd.f32 %v710, %v749
    %v751 = vpop.f32.mrf.mxu0
    %752 = vdwg.mxu0
    %753 = vst [vmem:[%s7] sm:$0xff] %v750
    // Predicated region
    $region34: #{digit_model_forward.1} parent=1 // pred_check
      _
    $region35: #{digit_model_forward.1} parent=1 // pred_check_branch
      %755 = sbr.rel (0) target = $region37
    $region36: #{digit_model_forward.1} parent=1 // pred_region
      _
    $region37: #{digit_model_forward.1} parent=1 // pred_fallthru
      _
    // Predicated region
    $region38: #{digit_model_forward.1} parent=1 // pred_check
      _
    $region39: #{digit_model_forward.1} parent=1 // pred_check_branch
      %757 = sbr.rel (0) target = $region41
    $region40: #{digit_model_forward.1} parent=1 // pred_region
      _
    $region41: #{digit_model_forward.1} parent=1 // pred_fallthru
      _
    %758 = vsyncpa [#allocation3], 1

</llo_original>
